<compile_context>
chip_gen: v5e
topology: v5e:2x2
jax: 0.10.0
libtpu: 0.0.40
codegen_flags: <defaults>
</compile_context>

<pallas_src>
import math

import jax
import jax.numpy as jnp
from jax.experimental import pallas as pl
from jax.experimental.pallas import tpu as pltpu

_LANE = 128
_SUBLANE = 8


def _ffnn_kernel(x_ref, w1_ref, b1_ref, w2_ref, b2_ref, o_ref):
    # hidden = tanh(x @ W1 + b1)   -- MXU matmul (f32 accumulate), EUP tanh
    h = jnp.tanh(
        jnp.dot(x_ref[...], w1_ref[...], preferred_element_type=jnp.float32)
        + b1_ref[...]
    )
    # out = hidden @ W2 + b2       -- lane-dense (out_p = 128) output store
    o_ref[...] = (
        jnp.dot(h, w2_ref[...], preferred_element_type=jnp.float32) + b2_ref[...]
    ).astype(o_ref.dtype)


def _round_up(x, m):
    return ((x + m - 1) // m) * m


def _tpu_cores_and_block_cap():
    """(# TensorCores per chip, max rows per batch block) for this backend."""
    try:
        kind = jax.devices()[0].device_kind.lower()
    except Exception:
        kind = ""
    if "v7" in kind:
        # 2 TCs/chip; 64 MiB VMEM (32 MiB scoped) -> keep per-block rows modest.
        return 2, 2048
    # v5e / v6e: single TensorCore, 128 MiB VMEM -> prefer one big block.
    return 1, 4096


def _choose_grid(batch, num_tc, max_block_rows):
    """Pick (nblocks, block_m). nblocks is a multiple of num_tc when splitting."""
    if num_tc >= 2 and batch > num_tc * _SUBLANE:
        per_core = math.ceil(batch / num_tc)
        k = max(1, math.ceil(per_core / max_block_rows))
        nblocks = num_tc * k
    else:
        nblocks = max(1, math.ceil(batch / max_block_rows))
    block_m = _round_up(math.ceil(batch / nblocks), _SUBLANE)
    return nblocks, block_m


def prepare_ffnn_params(w1, b1, w2, b2):
    """One-time weight prep (hoisted out of the forward hot path).

    w1: (in_dim, hid_dim), b1: (hid_dim,), w2: (hid_dim, out_dim), b2: (out_dim,).
    Only the output feature dim is zero-padded (to a lane multiple) so the
    kernel's output store is lane-dense; padded columns stay exactly zero.
    """
    w1 = jnp.asarray(w1, jnp.float32)
    b1 = jnp.asarray(b1, jnp.float32).reshape(1, -1)
    w2 = jnp.asarray(w2, jnp.float32)
    b2 = jnp.asarray(b2, jnp.float32).reshape(1, -1)
    out_dim = w2.shape[1]
    out_p = _round_up(out_dim, _LANE)
    w2_p = jnp.pad(w2, ((0, 0), (0, out_p - out_dim)))
    b2_p = jnp.pad(b2, ((0, 0), (0, out_p - out_dim)))
    return {"w1": w1, "b1": b1, "w2": w2_p, "b2": b2_p, "out_dim": out_dim}


def two_layer_ffnn(att_input, pooled_emb, params, *, num_tc=None, max_block_rows=None):
    """Pallas implementation of TwoLayerFFNNLayer.forward (eval mode).

    att_input is accepted for signature parity but (as in the PyTorch module)
    does not influence the returned value. `params` comes from
    prepare_ffnn_params() so weights are padded/cast once, not per call.
    """
    del att_input  # dropout(att_input) is computed then discarded in the reference

    w1, b1, w2_p, b2_p = params["w1"], params["b1"], params["w2"], params["b2"]
    out_dim = params["out_dim"]
    batch, in_dim = pooled_emb.shape
    hid_dim = w1.shape[1]
    out_p = w2_p.shape[1]

    auto_tc, auto_cap = _tpu_cores_and_block_cap()
    num_tc = auto_tc if num_tc is None else num_tc
    max_block_rows = auto_cap if max_block_rows is None else max_block_rows

    nblocks, block_m = _choose_grid(batch, num_tc, max_block_rows)
    batch_p = nblocks * block_m

    x = pooled_emb.astype(jnp.float32)
    if batch_p != batch:
        x = jnp.pad(x, ((0, batch_p - batch), (0, 0)))

    if nblocks == 1:
        # Single block, NO grid -> no pipeline prologue/epilogue overhead.
        out_padded = pl.pallas_call(
            _ffnn_kernel,
            out_shape=jax.ShapeDtypeStruct((batch_p, out_p), jnp.float32),
            in_specs=[pl.BlockSpec(memory_space=pltpu.MemorySpace.VMEM)] * 5,
            out_specs=pl.BlockSpec(memory_space=pltpu.MemorySpace.VMEM),
        )(x, w1, b1, w2_p, b2_p)
    else:
        # Batch-tiled grid ("parallel" so v7x's two TCs split it); weights/biases
        # are pinned at block (0,0) and stay VMEM-resident across the grid.
        # (pipeline_mode=pl.Buffered(1) on the pinned operands would drop their
        # redundant second buffers; left at default for portability.)
        out_padded = pl.pallas_call(
            _ffnn_kernel,
            out_shape=jax.ShapeDtypeStruct((batch_p, out_p), jnp.float32),
            grid=(nblocks,),
            in_specs=[
                pl.BlockSpec((block_m, in_dim), lambda i: (i, 0)),
                pl.BlockSpec((in_dim, hid_dim), lambda i: (0, 0)),
                pl.BlockSpec((1, hid_dim), lambda i: (0, 0)),
                pl.BlockSpec((hid_dim, out_p), lambda i: (0, 0)),
                pl.BlockSpec((1, out_p), lambda i: (0, 0)),
            ],
            out_specs=pl.BlockSpec((block_m, out_p), lambda i: (i, 0)),
            compiler_params=pltpu.CompilerParams(
                dimension_semantics=("parallel",)
            ),
        )(x, w1, b1, w2_p, b2_p)

    # Slice padded rows/cols back off outside the kernel.
    return out_padded[:batch, :out_dim]


def _init_linear(key, fan_in, fan_out):
    # Deterministic init mimicking nn.Linear: U(-1/sqrt(fan_in), 1/sqrt(fan_in)).
    kw, kb = jax.random.split(key)
    bound = 1.0 / jnp.sqrt(jnp.float32(fan_in))
    w = jax.random.uniform(kw, (fan_in, fan_out), jnp.float32, -bound, bound)
    b = jax.random.uniform(kb, (1, fan_out), jnp.float32, -bound, bound)
    return w, b


if __name__ == "__main__":
    # config: vocab_dim=32, fc_hidden_dim=64, num_classes=2, dropout (identity at eval)
    batch, vocab_dim, fc_hidden_dim, num_classes = 8, 32, 64, 2

    key = jax.random.PRNGKey(0)
    k_att, k_pool, k_l1, k_l2, k_big = jax.random.split(key, 5)

    att_input = jax.random.normal(k_att, (batch, vocab_dim), jnp.float32)
    pooled_emb = jax.random.normal(k_pool, (batch, vocab_dim), jnp.float32)

    w1, b1 = _init_linear(k_l1, vocab_dim, fc_hidden_dim)
    w2, b2 = _init_linear(k_l2, fc_hidden_dim, num_classes)

    # Weight padding/casting done ONCE (hoisted out of the per-call path).
    params = prepare_ffnn_params(w1, b1, w2, b2)

    # --- small-batch (gridless, single block) path ---
    out = two_layer_ffnn(att_input, pooled_emb, params)
    out = jax.block_until_ready(out)

    ref = jnp.tanh(pooled_emb @ w1 + b1) @ w2 + b2
    assert out.shape == (batch, num_classes)
    assert jnp.allclose(out, ref, atol=1e-5, rtol=1e-5)

    # --- larger batch, auto block/grid selection for this chip generation ---
    big_batch = 512
    big_emb = jax.random.normal(k_big, (big_batch, vocab_dim), jnp.float32)
    out_big = two_layer_ffnn(big_emb, big_emb, params)
    out_big = jax.block_until_ready(out_big)

    ref_big = jnp.tanh(big_emb @ w1 + b1) @ w2 + b2
    assert out_big.shape == (big_batch, num_classes)
    assert jnp.allclose(out_big, ref_big, atol=1e-5, rtol=1e-5)

    # --- force the batch-tiled grid path (weights pinned, "parallel" blocks) ---
    out_grid = two_layer_ffnn(big_emb, big_emb, params, max_block_rows=128)
    out_grid = jax.block_until_ready(out_grid)
    assert out_grid.shape == (big_batch, num_classes)
    assert jnp.allclose(out_grid, ref_big, atol=1e-5, rtol=1e-5)

    print("KERNEL_OK")
</pallas_src>

<mosaic_0001>
module attributes {stable_mosaic.version = 11 : i64} {
  func.func @_ffnn_kernel(%arg0: memref<8x32xf32, #tpu.memory_space<vmem>>, %arg1: memref<32x64xf32, #tpu.memory_space<vmem>>, %arg2: memref<1x64xf32, #tpu.memory_space<vmem>>, %arg3: memref<64x128xf32, #tpu.memory_space<vmem>>, %arg4: memref<1x128xf32, #tpu.memory_space<vmem>>, %arg5: memref<8x128xf32, #tpu.memory_space<vmem>>) attributes {dimension_semantics = [], scalar_prefetch = 0 : i64, scratch_operands = 0 : i64, tpu.core_type = #tpu.core_type<tc>} {
    %c0 = arith.constant 0 : index
    %c0_0 = arith.constant 0 : index
    %0 = vector.load %arg0[%c0, %c0_0] : memref<8x32xf32, #tpu.memory_space<vmem>>, vector<8x32xf32>
    %c0_1 = arith.constant 0 : index
    %c0_2 = arith.constant 0 : index
    %1 = vector.load %arg1[%c0_1, %c0_2] : memref<32x64xf32, #tpu.memory_space<vmem>>, vector<32x64xf32>
    %cst = arith.constant dense<0.000000e+00> : vector<8x64xf32>
    %2 = tpu.matmul %0, %1, %cst {dimension_numbers = #tpu.dot_dimension_numbers<[1], [0], [0], [1], [0, 0, 1, 1], [], []>} : vector<8x32xf32>, vector<32x64xf32>, vector<8x64xf32> -> vector<8x64xf32>
    %c0_3 = arith.constant 0 : index
    %c0_4 = arith.constant 0 : index
    %3 = vector.load %arg2[%c0_3, %c0_4] : memref<1x64xf32, #tpu.memory_space<vmem>>, vector<1x64xf32>
    %4 = vector.broadcast %3 : vector<1x64xf32> to vector<8x64xf32>
    %5 = arith.addf %2, %4 : vector<8x64xf32>
    %6 = math.tanh %5 : vector<8x64xf32>
    %c0_5 = arith.constant 0 : index
    %c0_6 = arith.constant 0 : index
    %7 = vector.load %arg3[%c0_5, %c0_6] : memref<64x128xf32, #tpu.memory_space<vmem>>, vector<64x128xf32>
    %cst_7 = arith.constant dense<0.000000e+00> : vector<8x128xf32>
    %8 = tpu.matmul %6, %7, %cst_7 {dimension_numbers = #tpu.dot_dimension_numbers<[1], [0], [0], [1], [0, 0, 1, 1], [], []>} : vector<8x64xf32>, vector<64x128xf32>, vector<8x128xf32> -> vector<8x128xf32>
    %c0_8 = arith.constant 0 : index
    %c0_9 = arith.constant 0 : index
    %9 = vector.load %arg4[%c0_8, %c0_9] : memref<1x128xf32, #tpu.memory_space<vmem>>, vector<1x128xf32>
    %10 = vector.broadcast %9 : vector<1x128xf32> to vector<8x128xf32>
    %11 = arith.addf %8, %10 : vector<8x128xf32>
    %c0_10 = arith.constant 0 : index
    %c0_11 = arith.constant 0 : index
    %12 = vector.load %arg5[%c0_10, %c0_11] : memref<8x128xf32, #tpu.memory_space<vmem>>, vector<8x128xf32>
    tpu.vector_store %arg5[%c0_10, %c0_11], %11 {strides = array<i32>} : memref<8x128xf32, #tpu.memory_space<vmem>>, vector<8x128xf32>,
    return
  }
}

</mosaic_0001>

<llo_original>
// kernel: tpu_custom_call.1
$region0: #{tpu_custom_call.1}
  #allocation0 [shape = 'u32[]', space=smem, size = 0x4, offset = 0x4, fixed_abs, tag = 'smem constant byte address 0x4 - core index']
  #allocation1 [shape = 'u32[72,128]{1,0:T(1,128)}', space=vmem, size = 0x9000, scoped, tag = 'internal scratch']
  %s0 = inlined_call_operand.hbm [shape: f32[8,32], index: 0, kind: input, shape index: {}]
  %s1 = inlined_call_operand.hbm [shape: f32[32,64], index: 1, kind: input, shape index: {}]
  %s2 = inlined_call_operand.vmem [shape: f32[1,64], index: 2, kind: input, shape index: {}]
  %s3 = inlined_call_operand.hbm [shape: f32[64,128], index: 3, kind: input, shape index: {}]
  %s4 = inlined_call_operand.vmem [shape: f32[1,128], index: 4, kind: input, shape index: {}]
  %s5 = inlined_call_operand.hbm [shape: f32[8,128], index: 5, kind: output, shape index: {}]
  %s6 = sld [smem:[#allocation0]]
  $region42: #{tpu_custom_call.1} parent=0
    _
  %s8 = ssub.s32 1, %s6
  %s9 = scalar_select 0, %s8, %s6
  $region1: #{tpu_custom_call.1} parent=0
    #allocation2 [shape = 'u8[4096]{0}', space=vmem, size = 0x1000, scoped, tag = 'input window, operand 0, single buffered']
    #allocation3 [shape = 's32[1]{0}', space=sflag, size = 0x4, scoped, tag = 'scoped memory for tpu_custom_call.1']
    #allocation4 [shape = 's32[1]{0}', space=sflag, size = 0x4, scoped, tag = 'scoped memory for tpu_custom_call.1']
    #allocation5 [shape = 'u8[16384]{0}', space=vmem, size = 0x4000, scoped, tag = 'input window, operand 1, single buffered']
    #allocation6 [shape = 's32[1]{0}', space=sflag, size = 0x4, scoped, tag = 'scoped memory for tpu_custom_call.1']
    #allocation7 [shape = 'u8[32768]{0}', space=vmem, size = 0x8000, scoped, tag = 'input window, operand 3, single buffered']
    #allocation8 [shape = 'u8[4096]{0}', space=vmem, size = 0x1000, scoped, tag = 'output window, operand 0, single buffered']
    %10 = vsyncpa [#allocation3], 0
    %11 = vsyncpa [#allocation6], 0
    %12 = vsyncpa [#allocation4], 0
    // Predicated region
    $region2: #{tpu_custom_call.1} parent=1 // pred_check
      _
    $region3: #{tpu_custom_call.1} parent=1 // pred_check_branch
      %14 = sbr.rel (0) target = $region5
    $region4: #{tpu_custom_call.1} parent=1 // pred_region
      %16 = vsyncadd [#allocation3], 0
      %s18 = sshll.u32 %s0, 4
      %s19 = int_to_ptr.hbm [resolvable:$true] %s18
      %s20 = sshll.u32 [#allocation2], 4
      %s21 = int_to_ptr.vmem [resolvable:$true] %s20
      %23 = dma.hbm_to_vmem [thread:$0]  %s19, 128, %s21, [#allocation3]
    $region5: #{tpu_custom_call.1} parent=1 // pred_fallthru
      _
    // Predicated region
    $region6: #{tpu_custom_call.1} parent=1 // pred_check
      _
    $region7: #{tpu_custom_call.1} parent=1 // pred_check_branch
      %25 = sbr.rel (0) target = $region9
    $region8: #{tpu_custom_call.1} parent=1 // pred_region
      %27 = vsyncadd [#allocation6], 0
      %s28 = sshll.u32 %s1, 4
      %s29 = int_to_ptr.hbm [resolvable:$true] %s28
      %s30 = sshll.u32 [#allocation5], 4
      %s31 = int_to_ptr.vmem [resolvable:$true] %s30
      %36 = dma.hbm_to_vmem [thread:$0]  %s29, 512, %s31, [#allocation6], 128, 128, 8
    $region9: #{tpu_custom_call.1} parent=1 // pred_fallthru
      _
    // Predicated region
    $region10: #{tpu_custom_call.1} parent=1 // pred_check
      _
    $region11: #{tpu_custom_call.1} parent=1 // pred_check_branch
      %38 = sbr.rel (0) target = $region13
    $region12: #{tpu_custom_call.1} parent=1 // pred_region
      _
    $region13: #{tpu_custom_call.1} parent=1 // pred_fallthru
      _
    // Predicated region
    $region14: #{tpu_custom_call.1} parent=1 // pred_check
      _
    $region15: #{tpu_custom_call.1} parent=1 // pred_check_branch
      %40 = sbr.rel (0) target = $region17
    $region16: #{tpu_custom_call.1} parent=1 // pred_region
      %42 = vsyncadd [#allocation6], 0
      %s43 = sshll.u32 %s3, 4
      %s44 = int_to_ptr.hbm [resolvable:$true] %s43
      %s45 = sshll.u32 [#allocation7], 4
      %s46 = int_to_ptr.vmem [resolvable:$true] %s45
      %51 = dma.hbm_to_vmem [thread:$0]  %s44, 1024, %s46, [#allocation6], 128, 128, 8
    $region17: #{tpu_custom_call.1} parent=1 // pred_fallthru
      _
    // Predicated region
    $region18: #{tpu_custom_call.1} parent=1 // pred_check
      _
    $region19: #{tpu_custom_call.1} parent=1 // pred_check_branch
      %53 = sbr.rel (0) target = $region21
    $region20: #{tpu_custom_call.1} parent=1 // pred_region
      _
    $region21: #{tpu_custom_call.1} parent=1 // pred_fallthru
      _
    // Predicated region
    $region22: #{tpu_custom_call.1} parent=1 // pred_check
      _
    $region23: #{tpu_custom_call.1} parent=1 // pred_check_branch
      %55 = sbr.rel (0) target = $region25
    $region24: #{tpu_custom_call.1} parent=1 // pred_region
      %57 = dma.done [#allocation3], 128
    $region25: #{tpu_custom_call.1} parent=1 // pred_fallthru
      _
    // Predicated region
    $region26: #{tpu_custom_call.1} parent=1 // pred_check
      _
    $region27: #{tpu_custom_call.1} parent=1 // pred_check_branch
      %59 = sbr.rel (0) target = $region29
    $region28: #{tpu_custom_call.1} parent=1 // pred_region
      %61 = dma.done [#allocation6], 512
    $region29: #{tpu_custom_call.1} parent=1 // pred_fallthru
      _
    // Predicated region
    $region30: #{tpu_custom_call.1} parent=1 // pred_check
      _
    $region31: #{tpu_custom_call.1} parent=1 // pred_check_branch
      %63 = sbr.rel (0) target = $region33
    $region32: #{tpu_custom_call.1} parent=1 // pred_region
      %65 = dma.done [#allocation6], 1024
    $region33: #{tpu_custom_call.1} parent=1 // pred_fallthru
      _
    %v66 = vld [vmem:[#allocation2] sm:$0xff]
    %v67 = vld [vmem:[#allocation5] sm:$0xff]
    %v68 = vld [vmem:[#allocation5 + $0x8] sm:$0xff]
    %v69 = vld [vmem:[#allocation5 + $0x10] sm:$0xff]
    %v70 = vld [vmem:[#allocation5 + $0x18] sm:$0xff]
    %v71 = vld [vmem:[%s2] sm:$0x1]
    %v73 = vperm.slane %v71, 0
    %vm75 = vcmask 261120
    %v77 = vsel %vm75, %v66, 0
    %79 = vmatpush.msra.mxu0 0.0
    %80 = vmatpush.msra.mxu0 0.0
    %81 = vmatpush.msra.mxu0 0.0
    %82 = vmatpush.msra.mxu0 0.0
    %83 = vmatpush.msra.mxu0 0.0
    %84 = vmatpush.msra.mxu0 0.0
    %85 = vmatpush.msra.mxu0 0.0
    %86 = vmatpush.msra.mxu0 0.0
    %87 = vmatpush.msra.mxu0 0.0
    %88 = vmatpush.msra.mxu0 0.0
    %89 = vmatpush.msra.mxu0 0.0
    %90 = vmatpush.msra.mxu0 0.0
    %91 = vmatpush.msra.mxu0 %v70
    %92 = vmatpush.msra.mxu0 %v69
    %93 = vmatpush.msra.mxu0 %v68
    %94 = vmatpush.msra.mxu0 %v67
    %95 = vmatmul.f32.gmra.mxu0 %v77
    %v96 = vpop.f32.mrf.mxu0
    %v97 = vadd.f32 %v73, %v96
    %98 = vdwg.mxu0
    %v99 = vtanh.pop %v97
    %v100 = vld [vmem:[#allocation7] sm:$0xff]
    %v101 = vld [vmem:[#allocation7 + $0x8] sm:$0xff]
    %v102 = vld [vmem:[#allocation7 + $0x10] sm:$0xff]
    %v103 = vld [vmem:[#allocation7 + $0x18] sm:$0xff]
    %v104 = vld [vmem:[#allocation7 + $0x20] sm:$0xff]
    %v105 = vld [vmem:[#allocation7 + $0x28] sm:$0xff]
    %v106 = vld [vmem:[#allocation7 + $0x30] sm:$0xff]
    %v107 = vld [vmem:[#allocation7 + $0x38] sm:$0xff]
    %v108 = vld [vmem:[%s4] sm:$0x1]
    %v110 = vperm.slane %v108, 0
    %vm112 = vcmask 523264
    %v114 = vsel %vm112, %v99, 0
    %116 = vmatpush.msra.mxu0 0.0
    %117 = vmatpush.msra.mxu0 0.0
    %118 = vmatpush.msra.mxu0 0.0
    %119 = vmatpush.msra.mxu0 0.0
    %120 = vmatpush.msra.mxu0 0.0
    %121 = vmatpush.msra.mxu0 0.0
    %122 = vmatpush.msra.mxu0 0.0
    %123 = vmatpush.msra.mxu0 0.0
    %124 = vmatpush.msra.mxu0 %v107
    %125 = vmatpush.msra.mxu0 %v106
    %126 = vmatpush.msra.mxu0 %v105
    %127 = vmatpush.msra.mxu0 %v104
    %128 = vmatpush.msra.mxu0 %v103
    %129 = vmatpush.msra.mxu0 %v102
    %130 = vmatpush.msra.mxu0 %v101
    %131 = vmatpush.msra.mxu0 %v100
    %132 = vmatmul.f32.gmra.mxu0 %v114
    %v133 = vpop.f32.mrf.mxu0
    %v134 = vadd.f32 %v110, %v133
    %135 = vdwg.mxu0
    %136 = vst [vmem:[#allocation8] sm:$0xff] %v134
    // Predicated region
    $region34: #{tpu_custom_call.1} parent=1 // pred_check
      _
    $region35: #{tpu_custom_call.1} parent=1 // pred_check_branch
      %138 = sbr.rel (0) target = $region37
    $region36: #{tpu_custom_call.1} parent=1 // pred_region
      %140 = vsyncadd [#allocation4], 0
      %s142 = sshll.u32 [#allocation8], 4
      %s143 = int_to_ptr.vmem [resolvable:$true] %s142
      %s144 = sshll.u32 %s5, 4
      %s145 = int_to_ptr.hbm [resolvable:$true] %s144
      %147 = dma.vmem_to_hbm [thread:$0]  %s143, 128, %s145, [#allocation4]
    $region37: #{tpu_custom_call.1} parent=1 // pred_fallthru
      _
    // Predicated region
    $region38: #{tpu_custom_call.1} parent=1 // pred_check
      _
    $region39: #{tpu_custom_call.1} parent=1 // pred_check_branch
      %149 = sbr.rel (0) target = $region41
    $region40: #{tpu_custom_call.1} parent=1 // pred_region
      %151 = dma.done [#allocation4], 128
    $region41: #{tpu_custom_call.1} parent=1 // pred_fallthru
      _
    %152 = vsyncpa [#allocation3], 1
    %153 = vsyncpa [#allocation6], 1
    %154 = vsyncpa [#allocation4], 1

</llo_original>
